<compile_context>
chip_gen: v6e
topology: v6e:2x2x1
jax: 0.10.0
libtpu: 0.0.40
codegen_flags: <defaults>
</compile_context>

<pallas_src>
import jax
import jax.numpy as jnp
from jax.experimental import pallas as pl
from jax.experimental.pallas import tpu as pltpu

LANE = 128
SUBLANE = 8


def _round_up(n, m):
    return ((n + m - 1) // m) * m


def _pad2d(a, rows, cols):
    """Zero-pad a 2-D array up to (rows, cols)."""
    out = jnp.zeros((rows, cols), a.dtype)
    return out.at[: a.shape[0], : a.shape[1]].set(a)


def _pick_tm(batch, *, tm_max=1024):
    """Batch tile: big enough to amortize per-step overhead, >=2 blocks when
    there is enough work (so both TensorCores are used on v7x), multiple of 8.
    tm_max=1024 keeps the f32 x tile + f32 temporaries + bf16 out tile well
    under v5e's 16 MiB scoped-VMEM default."""
    rows = _round_up(batch, SUBLANE)
    if rows <= 2 * SUBLANE:
        return rows
    if rows <= tm_max:
        if batch >= 512:
            # Split into >= 2 parallel blocks; keep the tile a multiple of 256.
            return max(256, _round_up(pl.cdiv(rows, 2), 256))
        return rows
    return tm_max


def mlp_kernel(x_ref, w1_ref, b1_ref, w2_ref, b2_ref, w3_ref, b3_ref, o_ref,
               *, matmul_dtype):
    # Downcast activations to the MXU dtype in-kernel (VPU slots have slack).
    x = x_ref[...].astype(matmul_dtype)
    # fc1 + ReLU : bf16 operands on the MXU, f32 accumulation, f32 epilogue.
    h1 = jnp.dot(x, w1_ref[...], preferred_element_type=jnp.float32)
    h1 = jnp.maximum(h1 + b1_ref[...], 0.0)
    # fc2 + ReLU
    h2 = jnp.dot(h1.astype(matmul_dtype), w2_ref[...],
                 preferred_element_type=jnp.float32)
    h2 = jnp.maximum(h2 + b2_ref[...], 0.0)
    # fc3 (no activation)
    out = jnp.dot(h2.astype(matmul_dtype), w3_ref[...],
                  preferred_element_type=jnp.float32)
    o_ref[...] = (out + b3_ref[...]).astype(o_ref.dtype)


def mlp_forward(x_nchw, params, *, tm=None, matmul_dtype=jnp.bfloat16,
                out_store_dtype=jnp.bfloat16):
    """x_nchw: (B, C, H, W) float32. Returns (B, num_classes) float32.

    Semantics match nn.Flatten -> Linear+ReLU -> Linear+ReLU -> Linear.
    Matmuls run in `matmul_dtype` (bf16 by default) with f32 accumulation.
    """
    w1, b1, w2, b2, w3, b3 = params
    B = x_nchw.shape[0]
    x = x_nchw.reshape(B, -1).astype(jnp.float32)  # nn.Flatten (row-major); no pad/cast copy
    D = x.shape[1]
    H1 = w1.shape[1]
    H2 = w2.shape[1]
    num_classes = w3.shape[1]

    # Lane-pad the (tiny) weight-side dims to multiples of 128 so every MXU
    # output / store is a full unmasked vreg.  Padded rows/cols/bias lanes are
    # exactly zero, so padded lanes of h1/h2/out stay zero and cannot leak.
    H1p = _round_up(H1, LANE)
    H2p = _round_up(H2, LANE)
    Op = _round_up(num_classes, LANE)

    w1p = _pad2d(w1.astype(jnp.float32), D, H1p).astype(matmul_dtype)
    w2p = _pad2d(w2.astype(jnp.float32), H1p, H2p).astype(matmul_dtype)
    w3p = _pad2d(w3.astype(jnp.float32), H2p, Op).astype(matmul_dtype)
    b1p = _pad2d(b1.reshape(1, -1).astype(jnp.float32), 1, H1p)
    b2p = _pad2d(b2.reshape(1, -1).astype(jnp.float32), 1, H2p)
    b3p = _pad2d(b3.reshape(1, -1).astype(jnp.float32), 1, Op)

    if tm is None:
        tm = _pick_tm(B)
    tm = max(SUBLANE, _round_up(min(tm, _round_up(B, SUBLANE)), SUBLANE))
    n_blocks = pl.cdiv(B, tm)  # partial last block handled by Pallas masking

    # Weights/biases: same block for every grid step -> VMEM-resident.
    resident = lambda shape: pl.BlockSpec(shape, lambda i: (0, 0))

    flops = 2 * B * (D * H1p + H1p * H2p + H2p * Op)
    bytes_accessed = (
        x.size * x.dtype.itemsize
        + sum(a.size * a.dtype.itemsize for a in (w1p, w2p, w3p, b1p, b2p, b3p))
        + B * Op * jnp.dtype(out_store_dtype).itemsize
    )

    import functools
    kernel = functools.partial(mlp_kernel, matmul_dtype=matmul_dtype)

    out = pl.pallas_call(
        kernel,
        out_shape=jax.ShapeDtypeStruct((B, Op), out_store_dtype),
        grid=(n_blocks,),
        in_specs=[
            pl.BlockSpec((tm, D), lambda i: (i, 0)),   # activations: pipelined
            resident(w1p.shape), resident(b1p.shape),
            resident(w2p.shape), resident(b2p.shape),
            resident(w3p.shape), resident(b3p.shape),
        ],
        out_specs=pl.BlockSpec((tm, Op), lambda i: (i, 0)),
        compiler_params=pltpu.CompilerParams(
            dimension_semantics=("parallel",),  # batch axis -> both TCs on v7x
        ),
        cost_estimate=pl.CostEstimate(
            flops=flops, transcendentals=0, bytes_accessed=bytes_accessed),
    )(x, w1p, b1p, w2p, b2p, w3p, b3p)

    # Strip lane padding, upcast to f32 for the caller.
    return out[:, :num_classes].astype(jnp.float32)


def init_params(key, input_dim, num_classes):
    """Deterministic init mimicking nn.Linear defaults: U(-1/sqrt(fan_in), +...)."""
    dims = [(input_dim, 128), (128, 64), (64, num_classes)]
    params = []
    for fan_in, fan_out in dims:
        key, kw, kb = jax.random.split(key, 3)
        bound = 1.0 / jnp.sqrt(fan_in)
        w = jax.random.uniform(kw, (fan_in, fan_out), jnp.float32, -bound, bound)
        b = jax.random.uniform(kb, (1, fan_out), jnp.float32, -bound, bound)
        params.extend([w, b])
    return tuple(params)


if __name__ == "__main__":
    key = jax.random.PRNGKey(0)
    B, C, H, W = 2, 1, 16, 16          # input (B, 1, H, W) per the module docstring
    input_dim = C * H * W              # 256
    num_classes = 10

    kx, kp = jax.random.split(key)
    x = jax.random.normal(kx, (B, C, H, W), jnp.float32)
    params = init_params(kp, input_dim, num_classes)

    out = jax.block_until_ready(mlp_forward(x, params))
    assert out.shape == (B, num_classes), out.shape

    # Cross-check against a plain-JAX f32 reference of the same math
    # (loose tolerance: kernel matmuls run in bf16 with f32 accumulation and
    # the output is stored in bf16).
    w1, b1, w2, b2, w3, b3 = params
    xf = x.reshape(B, -1)
    ref = jnp.maximum(xf @ w1 + b1, 0.0)
    ref = jnp.maximum(ref @ w2 + b2, 0.0)
    ref = ref @ w3 + b3
    assert jnp.allclose(out, ref, atol=5e-2, rtol=5e-2), float(
        jnp.max(jnp.abs(out - ref)))

    print("KERNEL_OK")
</pallas_src>

<mosaic_0001>
module attributes {stable_mosaic.version = 11 : i64} {
  func.func @mlp_kernel(%arg0: i32, %arg1: memref<8x256xf32, #tpu.memory_space<vmem>>, %arg2: memref<256x128xbf16, #tpu.memory_space<vmem>>, %arg3: memref<1x128xf32, #tpu.memory_space<vmem>>, %arg4: memref<128x128xbf16, #tpu.memory_space<vmem>>, %arg5: memref<1x128xf32, #tpu.memory_space<vmem>>, %arg6: memref<128x128xbf16, #tpu.memory_space<vmem>>, %arg7: memref<1x128xf32, #tpu.memory_space<vmem>>, %arg8: memref<8x128xbf16, #tpu.memory_space<vmem>>) attributes {dimension_semantics = [#tpu.dimension_semantics<parallel>], iteration_bounds = array<i64: 1>, scalar_prefetch = 0 : i64, scratch_operands = 0 : i64, tpu.core_type = #tpu.core_type<tc>, window_params = [{transform_indices = @transform_0, window_bounds = array<i64: 8, 256>}, {pipeline_mode = #tpu.pipeline_mode<synchronous>, transform_indices = @transform_1, window_bounds = array<i64: 256, 128>}, {pipeline_mode = #tpu.pipeline_mode<synchronous>, transform_indices = @transform_2, window_bounds = array<i64: 1, 128>}, {pipeline_mode = #tpu.pipeline_mode<synchronous>, transform_indices = @transform_3, window_bounds = array<i64: 128, 128>}, {pipeline_mode = #tpu.pipeline_mode<synchronous>, transform_indices = @transform_4, window_bounds = array<i64: 1, 128>}, {pipeline_mode = #tpu.pipeline_mode<synchronous>, transform_indices = @transform_5, window_bounds = array<i64: 128, 128>}, {pipeline_mode = #tpu.pipeline_mode<synchronous>, transform_indices = @transform_6, window_bounds = array<i64: 1, 128>}, {transform_indices = @transform_7, window_bounds = array<i64: 8, 128>}]} {
    %c0 = arith.constant 0 : index
    %c0_0 = arith.constant 0 : index
    %0 = vector.load %arg1[%c0, %c0_0] : memref<8x256xf32, #tpu.memory_space<vmem>>, vector<8x256xf32>
    %1 = arith.truncf %0 : vector<8x256xf32> to vector<8x256xbf16>
    %c0_1 = arith.constant 0 : index
    %c0_2 = arith.constant 0 : index
    %2 = vector.load %arg2[%c0_1, %c0_2] : memref<256x128xbf16, #tpu.memory_space<vmem>>, vector<256x128xbf16>
    %cst = arith.constant dense<0.000000e+00> : vector<8x128xf32>
    %3 = tpu.matmul %1, %2, %cst {dimension_numbers = #tpu.dot_dimension_numbers<[1], [0], [0], [1], [0, 0, 1, 1], [], []>} : vector<8x256xbf16>, vector<256x128xbf16>, vector<8x128xf32> -> vector<8x128xf32>
    %c0_3 = arith.constant 0 : index
    %c0_4 = arith.constant 0 : index
    %4 = vector.load %arg3[%c0_3, %c0_4] : memref<1x128xf32, #tpu.memory_space<vmem>>, vector<1x128xf32>
    %5 = vector.broadcast %4 : vector<1x128xf32> to vector<8x128xf32>
    %6 = arith.addf %3, %5 : vector<8x128xf32>
    %cst_5 = arith.constant 0.000000e+00 : f32
    %7 = vector.broadcast %cst_5 : f32 to vector<8x128xf32>
    %8 = arith.maximumf %6, %7 : vector<8x128xf32>
    %9 = arith.truncf %8 : vector<8x128xf32> to vector<8x128xbf16>
    %c0_6 = arith.constant 0 : index
    %c0_7 = arith.constant 0 : index
    %10 = vector.load %arg4[%c0_6, %c0_7] : memref<128x128xbf16, #tpu.memory_space<vmem>>, vector<128x128xbf16>
    %cst_8 = arith.constant dense<0.000000e+00> : vector<8x128xf32>
    %11 = tpu.matmul %9, %10, %cst_8 {dimension_numbers = #tpu.dot_dimension_numbers<[1], [0], [0], [1], [0, 0, 1, 1], [], []>} : vector<8x128xbf16>, vector<128x128xbf16>, vector<8x128xf32> -> vector<8x128xf32>
    %c0_9 = arith.constant 0 : index
    %c0_10 = arith.constant 0 : index
    %12 = vector.load %arg5[%c0_9, %c0_10] : memref<1x128xf32, #tpu.memory_space<vmem>>, vector<1x128xf32>
    %13 = vector.broadcast %12 : vector<1x128xf32> to vector<8x128xf32>
    %14 = arith.addf %11, %13 : vector<8x128xf32>
    %cst_11 = arith.constant 0.000000e+00 : f32
    %15 = vector.broadcast %cst_11 : f32 to vector<8x128xf32>
    %16 = arith.maximumf %14, %15 : vector<8x128xf32>
    %17 = arith.truncf %16 : vector<8x128xf32> to vector<8x128xbf16>
    %c0_12 = arith.constant 0 : index
    %c0_13 = arith.constant 0 : index
    %18 = vector.load %arg6[%c0_12, %c0_13] : memref<128x128xbf16, #tpu.memory_space<vmem>>, vector<128x128xbf16>
    %cst_14 = arith.constant dense<0.000000e+00> : vector<8x128xf32>
    %19 = tpu.matmul %17, %18, %cst_14 {dimension_numbers = #tpu.dot_dimension_numbers<[1], [0], [0], [1], [0, 0, 1, 1], [], []>} : vector<8x128xbf16>, vector<128x128xbf16>, vector<8x128xf32> -> vector<8x128xf32>
    %c0_15 = arith.constant 0 : index
    %c0_16 = arith.constant 0 : index
    %20 = vector.load %arg7[%c0_15, %c0_16] : memref<1x128xf32, #tpu.memory_space<vmem>>, vector<1x128xf32>
    %21 = vector.broadcast %20 : vector<1x128xf32> to vector<8x128xf32>
    %22 = arith.addf %19, %21 : vector<8x128xf32>
    %23 = arith.truncf %22 : vector<8x128xf32> to vector<8x128xbf16>
    %c0_17 = arith.constant 0 : index
    %c0_18 = arith.constant 0 : index
    %24 = vector.load %arg8[%c0_17, %c0_18] : memref<8x128xbf16, #tpu.memory_space<vmem>>, vector<8x128xbf16>
    tpu.vector_store %arg8[%c0_17, %c0_18], %23 {strides = array<i32>} : memref<8x128xbf16, #tpu.memory_space<vmem>>, vector<8x128xbf16>,
    return
  }
  func.func @transform_0(%arg0: i32) -> (i32, i32) {
    %c0_i32 = arith.constant 0 : i32
    %c0_i32_0 = arith.constant 0 : i32
    return %arg0, %c0_i32 : i32, i32
  }
  func.func @transform_1(%arg0: i32) -> (i32, i32) {
    %c0_i32 = arith.constant 0 : i32
    %c0_i32_0 = arith.constant 0 : i32
    %c0_i32_1 = arith.constant 0 : i32
    return %c0_i32, %c0_i32_0 : i32, i32
  }
  func.func @transform_2(%arg0: i32) -> (i32, i32) {
    %c0_i32 = arith.constant 0 : i32
    %c0_i32_0 = arith.constant 0 : i32
    %c0_i32_1 = arith.constant 0 : i32
    return %c0_i32, %c0_i32_0 : i32, i32
  }
  func.func @transform_3(%arg0: i32) -> (i32, i32) {
    %c0_i32 = arith.constant 0 : i32
    %c0_i32_0 = arith.constant 0 : i32
    %c0_i32_1 = arith.constant 0 : i32
    return %c0_i32, %c0_i32_0 : i32, i32
  }
  func.func @transform_4(%arg0: i32) -> (i32, i32) {
    %c0_i32 = arith.constant 0 : i32
    %c0_i32_0 = arith.constant 0 : i32
    %c0_i32_1 = arith.constant 0 : i32
    return %c0_i32, %c0_i32_0 : i32, i32
  }
  func.func @transform_5(%arg0: i32) -> (i32, i32) {
    %c0_i32 = arith.constant 0 : i32
    %c0_i32_0 = arith.constant 0 : i32
    %c0_i32_1 = arith.constant 0 : i32
    return %c0_i32, %c0_i32_0 : i32, i32
  }
  func.func @transform_6(%arg0: i32) -> (i32, i32) {
    %c0_i32 = arith.constant 0 : i32
    %c0_i32_0 = arith.constant 0 : i32
    %c0_i32_1 = arith.constant 0 : i32
    return %c0_i32, %c0_i32_0 : i32, i32
  }
  func.func @transform_7(%arg0: i32) -> (i32, i32) {
    %c0_i32 = arith.constant 0 : i32
    %c0_i32_0 = arith.constant 0 : i32
    return %arg0, %c0_i32 : i32, i32
  }
}

</mosaic_0001>

<llo_original>
// kernel: tpu_custom_call.1
$region0: #{tpu_custom_call.1}
  #allocation0 [shape = 'u32[]', space=smem, size = 0x4, offset = 0x4, fixed_abs, tag = 'smem constant byte address 0x4 - core index']
  #allocation1 [shape = 'u32[144,128]{1,0:T(1,128)}', space=vmem, size = 0x12000, scoped, tag = 'internal scratch']
  %s0 = inlined_call_operand.hbm [shape: f32[2,256], index: 0, kind: input, shape index: {}]
  %s1 = inlined_call_operand.hbm [shape: bf16[256,128], index: 1, kind: input, shape index: {}]
  %s2 = inlined_call_operand.vmem [shape: f32[1,128], index: 2, kind: input, shape index: {}]
  %s3 = inlined_call_operand.hbm [shape: bf16[128,128], index: 3, kind: input, shape index: {}]
  %s4 = inlined_call_operand.vmem [shape: f32[1,128], index: 4, kind: input, shape index: {}]
  %s5 = inlined_call_operand.hbm [shape: bf16[128,128], index: 5, kind: input, shape index: {}]
  %s6 = inlined_call_operand.vmem [shape: f32[1,128], index: 6, kind: input, shape index: {}]
  %s7 = inlined_call_operand.hbm [shape: bf16[2,128], index: 7, kind: output, shape index: {}]
  %s8 = sld [smem:[#allocation0]]
  $region54: #{tpu_custom_call.1} parent=0
    _
  %s10 = ssub.s32 1, %s8
  %s11 = scalar_select 0, %s10, %s8
  $region1: #{tpu_custom_call.1} parent=0
    #allocation2 [shape = 'u8[8192]{0}', space=vmem, size = 0x2000, scoped, tag = 'input window, operand 0, single buffered']
    #allocation3 [shape = 's32[1]{0}', space=sflag, size = 0x4, scoped, tag = 'scoped memory for tpu_custom_call.1']
    #allocation4 [shape = 's32[1]{0}', space=sflag, size = 0x4, scoped, tag = 'scoped memory for tpu_custom_call.1']
    #allocation5 [shape = 'u8[65536]{0}', space=vmem, size = 0x10000, scoped, tag = 'input window, operand 1, single buffered']
    #allocation6 [shape = 's32[1]{0}', space=sflag, size = 0x4, scoped, tag = 'scoped memory for tpu_custom_call.1']
    #allocation7 [shape = 'u8[32768]{0}', space=vmem, size = 0x8000, scoped, tag = 'input window, operand 3, single buffered']
    #allocation8 [shape = 'u8[32768]{0}', space=vmem, size = 0x8000, scoped, tag = 'input window, operand 5, single buffered']
    #allocation9 [shape = 's32[1]{0}', space=sflag, size = 0x4, scoped, tag = 'scoped memory for tpu_custom_call.1']
    #allocation10 [shape = 'u8[2048]{0}', space=vmem, size = 0x800, scoped, tag = 'output window, operand 0, single buffered']
    %12 = vsyncpa [#allocation3], 0
    %13 = vsyncpa [#allocation6], 0
    %14 = vsyncpa [#allocation9], 0
    %15 = vsyncpa [#allocation4], 0
    // Predicated region
    $region2: #{tpu_custom_call.1} parent=1 // pred_check
      _
    $region3: #{tpu_custom_call.1} parent=1 // pred_check_branch
      %17 = sbr.rel (0) target = $region5
    $region4: #{tpu_custom_call.1} parent=1 // pred_region
      %s19 = ssub.s32 256, 64
      %20 = vsyncadd [#allocation3], %s19
      %s21 = sshll.u32 [#allocation2], 4
      %s22 = int_to_ptr.vmem [resolvable:$true] %s21
      %27 = dma.hbm_to_vmem [thread:$0]  %s0, 64, %s22, [#allocation3], 64, 64, 4
    $region5: #{tpu_custom_call.1} parent=1 // pred_fallthru
      _
    // Predicated region
    $region6: #{tpu_custom_call.1} parent=1 // pred_check
      _
    $region7: #{tpu_custom_call.1} parent=1 // pred_check_branch
      %29 = sbr.rel (0) target = $region9
    $region8: #{tpu_custom_call.1} parent=1 // pred_region
      %s31 = ssub.s32 2048, 2048
      %32 = vsyncadd [#allocation6], %s31
      %s33 = sshll.u32 [#allocation5], 4
      %s34 = int_to_ptr.vmem [resolvable:$true] %s33
      %39 = dma.hbm_to_vmem [thread:$0]  %s1, 2048, %s34, [#allocation6], 64, 64, 4
    $region9: #{tpu_custom_call.1} parent=1 // pred_fallthru
      _
    // Predicated region
    $region10: #{tpu_custom_call.1} parent=1 // pred_check
      _
    $region11: #{tpu_custom_call.1} parent=1 // pred_check_branch
      %41 = sbr.rel (0) target = $region13
    $region12: #{tpu_custom_call.1} parent=1 // pred_region
      _
    $region13: #{tpu_custom_call.1} parent=1 // pred_fallthru
      _
    // Predicated region
    $region14: #{tpu_custom_call.1} parent=1 // pred_check
      _
    $region15: #{tpu_custom_call.1} parent=1 // pred_check_branch
      %43 = sbr.rel (0) target = $region17
    $region16: #{tpu_custom_call.1} parent=1 // pred_region
      %s45 = ssub.s32 1024, 1024
      %46 = vsyncadd [#allocation6], %s45
      %s47 = sshll.u32 [#allocation7], 4
      %s48 = int_to_ptr.vmem [resolvable:$true] %s47
      %53 = dma.hbm_to_vmem [thread:$0]  %s3, 1024, %s48, [#allocation6], 64, 64, 4
    $region17: #{tpu_custom_call.1} parent=1 // pred_fallthru
      _
    // Predicated region
    $region18: #{tpu_custom_call.1} parent=1 // pred_check
      _
    $region19: #{tpu_custom_call.1} parent=1 // pred_check_branch
      %55 = sbr.rel (0) target = $region21
    $region20: #{tpu_custom_call.1} parent=1 // pred_region
      _
    $region21: #{tpu_custom_call.1} parent=1 // pred_fallthru
      _
    // Predicated region
    $region22: #{tpu_custom_call.1} parent=1 // pred_check
      _
    $region23: #{tpu_custom_call.1} parent=1 // pred_check_branch
      %57 = sbr.rel (0) target = $region25
    $region24: #{tpu_custom_call.1} parent=1 // pred_region
      %s59 = ssub.s32 1024, 1024
      %60 = vsyncadd [#allocation9], %s59
      %s61 = sshll.u32 [#allocation8], 4
      %s62 = int_to_ptr.vmem [resolvable:$true] %s61
      %67 = dma.hbm_to_vmem [thread:$0]  %s5, 1024, %s62, [#allocation9], 64, 64, 4
    $region25: #{tpu_custom_call.1} parent=1 // pred_fallthru
      _
    // Predicated region
    $region26: #{tpu_custom_call.1} parent=1 // pred_check
      _
    $region27: #{tpu_custom_call.1} parent=1 // pred_check_branch
      %69 = sbr.rel (0) target = $region29
    $region28: #{tpu_custom_call.1} parent=1 // pred_region
      _
    $region29: #{tpu_custom_call.1} parent=1 // pred_fallthru
      _
    // Predicated region
    $region30: #{tpu_custom_call.1} parent=1 // pred_check
      _
    $region31: #{tpu_custom_call.1} parent=1 // pred_check_branch
      %71 = sbr.rel (0) target = $region33
    $region32: #{tpu_custom_call.1} parent=1 // pred_region
      %72 = dma.done [#allocation3], 256
    $region33: #{tpu_custom_call.1} parent=1 // pred_fallthru
      _
    // Predicated region
    $region34: #{tpu_custom_call.1} parent=1 // pred_check
      _
    $region35: #{tpu_custom_call.1} parent=1 // pred_check_branch
      %74 = sbr.rel (0) target = $region37
    $region36: #{tpu_custom_call.1} parent=1 // pred_region
      %75 = dma.done [#allocation6], 2048
    $region37: #{tpu_custom_call.1} parent=1 // pred_fallthru
      _
    // Predicated region
    $region38: #{tpu_custom_call.1} parent=1 // pred_check
      _
    $region39: #{tpu_custom_call.1} parent=1 // pred_check_branch
      %77 = sbr.rel (0) target = $region41
    $region40: #{tpu_custom_call.1} parent=1 // pred_region
      %78 = dma.done [#allocation6], 1024
    $region41: #{tpu_custom_call.1} parent=1 // pred_fallthru
      _
    // Predicated region
    $region42: #{tpu_custom_call.1} parent=1 // pred_check
      _
    $region43: #{tpu_custom_call.1} parent=1 // pred_check_branch
      %80 = sbr.rel (0) target = $region45
    $region44: #{tpu_custom_call.1} parent=1 // pred_region
      %81 = dma.done [#allocation9], 1024
    $region45: #{tpu_custom_call.1} parent=1 // pred_fallthru
      _
    %v83 = vld [vmem:[#allocation2] sm:$0xf]
    %v84 = vld [vmem:[#allocation2 + $0x4] sm:$0xf]
    %v85 = vld [vmem:[#allocation2 + $0x8] sm:$0xf]
    %v86 = vld [vmem:[#allocation2 + $0xc] sm:$0xf]
    %v91 = vcombine.low %v83, %v84
    %v92 = vcombine.low %v85, %v86
    %v94 = vunpack.c.l.s4 1983009808
    %v95 = vunpack.c.0.s8 %v94
    %v96 = vlaneseq
    %v97 = vshrl.u32 %v96, 7
    %v98 = vsub.s32 %v95, %v97
    %v99 = vrot.slane %v91, %v98
    %v101 = vunpack.c.l.s4 1983009808
    %v102 = vunpack.c.0.s8 %v101
    %v103 = vlaneseq
    %v104 = vshrl.u32 %v103, 7
    %v105 = vsub.s32 %v102, %v104
    %v106 = vrot.slane %v92, %v105
    %v107 = vcombine.low %v99, %v106
    %v108 = vcombine.high %v99, %v106
    %v111 = vpack.c.bf16 %v107, %v107
    %v112 = vpack.c.bf16 %v108, %v108
    %v113 = vld [vmem:[#allocation5] sm:$0xf]
    %v114 = vld [vmem:[#allocation5 + $0x4] sm:$0xf]
    %v115 = vld [vmem:[#allocation5 + $0x8] sm:$0xf]
    %v116 = vld [vmem:[#allocation5 + $0xc] sm:$0xf]
    %v117 = vld [vmem:[#allocation5 + $0x10] sm:$0xf]
    %v118 = vld [vmem:[#allocation5 + $0x14] sm:$0xf]
    %v119 = vld [vmem:[#allocation5 + $0x18] sm:$0xf]
    %v120 = vld [vmem:[#allocation5 + $0x1c] sm:$0xf]
    %v121 = vld [vmem:[#allocation5 + $0x20] sm:$0xf]
    %v122 = vld [vmem:[#allocation5 + $0x24] sm:$0xf]
    %v123 = vld [vmem:[#allocation5 + $0x28] sm:$0xf]
    %v124 = vld [vmem:[#allocation5 + $0x2c] sm:$0xf]
    %v125 = vld [vmem:[#allocation5 + $0x30] sm:$0xf]
    %v126 = vld [vmem:[#allocation5 + $0x34] sm:$0xf]
    %v127 = vld [vmem:[#allocation5 + $0x38] sm:$0xf]
    %v128 = vld [vmem:[#allocation5 + $0x3c] sm:$0xf]
    %v129 = vld [vmem:[#allocation5 + $0x40] sm:$0xf]
    %v130 = vld [vmem:[#allocation5 + $0x44] sm:$0xf]
    %v131 = vld [vmem:[#allocation5 + $0x48] sm:$0xf]
    %v132 = vld [vmem:[#allocation5 + $0x4c] sm:$0xf]
    %v133 = vld [vmem:[#allocation5 + $0x50] sm:$0xf]
    %v134 = vld [vmem:[#allocation5 + $0x54] sm:$0xf]
    %v135 = vld [vmem:[#allocation5 + $0x58] sm:$0xf]
    %v136 = vld [vmem:[#allocation5 + $0x5c] sm:$0xf]
    %v137 = vld [vmem:[#allocation5 + $0x60] sm:$0xf]
    %v138 = vld [vmem:[#allocation5 + $0x64] sm:$0xf]
    %v139 = vld [vmem:[#allocation5 + $0x68] sm:$0xf]
    %v140 = vld [vmem:[#allocation5 + $0x6c] sm:$0xf]
    %v141 = vld [vmem:[#allocation5 + $0x70] sm:$0xf]
    %v142 = vld [vmem:[#allocation5 + $0x74] sm:$0xf]
    %v143 = vld [vmem:[#allocation5 + $0x78] sm:$0xf]
    %v144 = vld [vmem:[#allocation5 + $0x7c] sm:$0xf]
    %v145 = vld [vmem:[%s2] sm:$0x1]
    %v147 = vlaneseq
    %v148 = vshrl.u32 %v147, 7
    %v149 = vsub.s32 0, %v148
    %v150 = vrot.slane %v145, %v149
    %v184 = vunpack.c.l.b16 %v113
    %v185 = vunpack.c.l.b16 %v114
    %v186 = vunpack.c.l.b16 %v115
    %v187 = vunpack.c.l.b16 %v116
    %v188 = vunpack.c.l.b16 %v117
    %v189 = vunpack.c.l.b16 %v118
    %v190 = vunpack.c.l.b16 %v119
    %v191 = vunpack.c.l.b16 %v120
    %v192 = vunpack.c.l.b16 %v121
    %v193 = vunpack.c.l.b16 %v122
    %v194 = vunpack.c.l.b16 %v123
    %v195 = vunpack.c.l.b16 %v124
    %v196 = vunpack.c.l.b16 %v125
    %v197 = vunpack.c.l.b16 %v126
    %v198 = vunpack.c.l.b16 %v127
    %v199 = vunpack.c.l.b16 %v128
    %v200 = vunpack.c.l.b16 %v129
    %v201 = vunpack.c.l.b16 %v130
    %v202 = vunpack.c.l.b16 %v131
    %v203 = vunpack.c.l.b16 %v132
    %v204 = vunpack.c.l.b16 %v133
    %v205 = vunpack.c.l.b16 %v134
    %v206 = vunpack.c.l.b16 %v135
    %v207 = vunpack.c.l.b16 %v136
    %v208 = vunpack.c.l.b16 %v137
    %v209 = vunpack.c.l.b16 %v138
    %v210 = vunpack.c.l.b16 %v139
    %v211 = vunpack.c.l.b16 %v140
    %v212 = vunpack.c.l.b16 %v141
    %v213 = vunpack.c.l.b16 %v142
    %v214 = vunpack.c.l.b16 %v143
    %v215 = vunpack.c.l.b16 %v144
    %v216 = vpack.c.b16 %v185, %v184
    %v217 = vpack.c.b16 %v187, %v186
    %v218 = vpack.c.b16 %v189, %v188
    %v219 = vpack.c.b16 %v191, %v190
    %v220 = vpack.c.b16 %v193, %v192
    %v221 = vpack.c.b16 %v195, %v194
    %v222 = vpack.c.b16 %v197, %v196
    %v223 = vpack.c.b16 %v199, %v198
    %v224 = vpack.c.b16 %v201, %v200
    %v225 = vpack.c.b16 %v203, %v202
    %v226 = vpack.c.b16 %v205, %v204
    %v227 = vpack.c.b16 %v207, %v206
    %v228 = vpack.c.b16 %v209, %v208
    %v229 = vpack.c.b16 %v211, %v210
    %v230 = vpack.c.b16 %v213, %v212
    %v231 = vpack.c.b16 %v215, %v214
    %248 = vmatprep.subr.bf16.mxu0 0
    %249 = vmatpush1.bf16.msra.mxu0 %v223
    %250 = vmatprep.subr.bf16.mxu0 0
    %251 = vmatpush1.bf16.msra.mxu0 %v222
    %252 = vmatprep.subr.bf16.mxu0 0
    %253 = vmatpush1.bf16.msra.mxu0 %v221
    %254 = vmatprep.subr.bf16.mxu0 0
    %255 = vmatpush1.bf16.msra.mxu0 %v220
    %256 = vmatprep.subr.bf16.mxu0 0
    %257 = vmatpush1.bf16.msra.mxu0 %v219
    %258 = vmatprep.subr.bf16.mxu0 0
    %259 = vmatpush1.bf16.msra.mxu0 %v218
    %260 = vmatprep.subr.bf16.mxu0 0
    %261 = vmatpush1.bf16.msra.mxu0 %v217
    %262 = vmatprep.subr.bf16.mxu0 0
    %263 = vmatpush1.bf16.msra.mxu0 %v216
    %264 = vmatprep.subr.bf16.mxu0 0
    %265 = vmatpush2.bf16.msra.mxu0 %v231
    %266 = vmatprep.subr.bf16.mxu0 0
    %267 = vmatpush2.bf16.msra.mxu0 %v230
    %268 = vmatprep.subr.bf16.mxu0 0
    %269 = vmatpush2.bf16.msra.mxu0 %v229
    %270 = vmatprep.subr.bf16.mxu0 0
    %271 = vmatpush2.bf16.msra.mxu0 %v228
    %272 = vmatprep.subr.bf16.mxu0 0
    %273 = vmatpush2.bf16.msra.mxu0 %v227
    %274 = vmatprep.subr.bf16.mxu0 0
    %275 = vmatpush2.bf16.msra.mxu0 %v226
    %276 = vmatprep.subr.bf16.mxu0 0
    %277 = vmatpush2.bf16.msra.mxu0 %v225
    %278 = vmatprep.subr.bf16.mxu0 0
    %279 = vmatpush2.bf16.msra.mxu0 %v224
    %280 = vmatprep.mubr.bf16.mxu0 %v112
    %281 = vmatmul.mubr.bf16.gmra.mxu0 %v111
    %v282 = vpop.f32.mrf.mxu0
    %v283 = vadd.f32 %v150, %v282
    %v284 = vpop.f32.mrf.mxu0
    %v285 = vpop.f32.mrf.mxu0
    %v286 = vpop.f32.mrf.mxu0
    %287 = vdwg.mxu0
    %v288 = vmax.f32 %v283, 0.0
    %v289 = vpack.c.bf16 %v288, %v288
    %v290 = vld [vmem:[#allocation7] sm:$0xf]
    %v291 = vld [vmem:[#allocation7 + $0x4] sm:$0xf]
    %v292 = vld [vmem:[#allocation7 + $0x8] sm:$0xf]
    %v293 = vld [vmem:[#allocation7 + $0xc] sm:$0xf]
    %v294 = vld [vmem:[#allocation7 + $0x10] sm:$0xf]
    %v295 = vld [vmem:[#allocation7 + $0x14] sm:$0xf]
    %v296 = vld [vmem:[#allocation7 + $0x18] sm:$0xf]
    %v297 = vld [vmem:[#allocation7 + $0x1c] sm:$0xf]
    %v298 = vld [vmem:[#allocation7 + $0x20] sm:$0xf]
    %v299 = vld [vmem:[#allocation7 + $0x24] sm:$0xf]
    %v300 = vld [vmem:[#allocation7 + $0x28] sm:$0xf]
    %v301 = vld [vmem:[#allocation7 + $0x2c] sm:$0xf]
    %v302 = vld [vmem:[#allocation7 + $0x30] sm:$0xf]
    %v303 = vld [vmem:[#allocation7 + $0x34] sm:$0xf]
    %v304 = vld [vmem:[#allocation7 + $0x38] sm:$0xf]
    %v305 = vld [vmem:[#allocation7 + $0x3c] sm:$0xf]
    %v306 = vld [vmem:[%s4] sm:$0x1]
    %v308 = vlaneseq
    %v309 = vshrl.u32 %v308, 7
    %v310 = vsub.s32 0, %v309
    %v311 = vrot.slane %v306, %v310
    %v329 = vunpack.c.l.b16 %v290
    %v330 = vunpack.c.l.b16 %v291
    %v331 = vunpack.c.l.b16 %v292
    %v332 = vunpack.c.l.b16 %v293
    %v333 = vunpack.c.l.b16 %v294
    %v334 = vunpack.c.l.b16 %v295
    %v335 = vunpack.c.l.b16 %v296
    %v336 = vunpack.c.l.b16 %v297
    %v337 = vunpack.c.l.b16 %v298
    %v338 = vunpack.c.l.b16 %v299
    %v339 = vunpack.c.l.b16 %v300
    %v340 = vunpack.c.l.b16 %v301
    %v341 = vunpack.c.l.b16 %v302
    %v342 = vunpack.c.l.b16 %v303
    %v343 = vunpack.c.l.b16 %v304
    %v344 = vunpack.c.l.b16 %v305
    %v345 = vpack.c.b16 %v330, %v329
    %v346 = vpack.c.b16 %v332, %v331
    %v347 = vpack.c.b16 %v334, %v333
    %v348 = vpack.c.b16 %v336, %v335
    %v349 = vpack.c.b16 %v338, %v337
    %v350 = vpack.c.b16 %v340, %v339
    %v351 = vpack.c.b16 %v342, %v341
    %v352 = vpack.c.b16 %v344, %v343
    %361 = vmatprep.subr.bf16.mxu0 0
    %362 = vmatpush1.bf16.msra.mxu0 %v352
    %363 = vmatprep.subr.bf16.mxu0 0
    %364 = vmatpush1.bf16.msra.mxu0 %v351
    %365 = vmatprep.subr.bf16.mxu0 0
    %366 = vmatpush1.bf16.msra.mxu0 %v350
    %367 = vmatprep.subr.bf16.mxu0 0
    %368 = vmatpush1.bf16.msra.mxu0 %v349
    %369 = vmatprep.subr.bf16.mxu0 0
    %370 = vmatpush1.bf16.msra.mxu0 %v348
    %371 = vmatprep.subr.bf16.mxu0 0
    %372 = vmatpush1.bf16.msra.mxu0 %v347
    %373 = vmatprep.subr.bf16.mxu0 0
    %374 = vmatpush1.bf16.msra.mxu0 %v346
    %375 = vmatprep.subr.bf16.mxu0 0
    %376 = vmatpush1.bf16.msra.mxu0 %v345
    %377 = vmatprep.subr.bf16.mxu0 0
    %378 = vmatpush2.bf16.msra.mxu0 0
    %379 = vmatprep.subr.bf16.mxu0 0
    %380 = vmatpush2.bf16.msra.mxu0 0
    %381 = vmatprep.subr.bf16.mxu0 0
    %382 = vmatpush2.bf16.msra.mxu0 0
    %383 = vmatprep.subr.bf16.mxu0 0
    %384 = vmatpush2.bf16.msra.mxu0 0
    %385 = vmatprep.subr.bf16.mxu0 0
    %386 = vmatpush2.bf16.msra.mxu0 0
    %387 = vmatprep.subr.bf16.mxu0 0
    %388 = vmatpush2.bf16.msra.mxu0 0
    %389 = vmatprep.subr.bf16.mxu0 0
    %390 = vmatpush2.bf16.msra.mxu0 0
    %391 = vmatprep.subr.bf16.mxu0 0
    %392 = vmatpush2.bf16.msra.mxu0 0
    %393 = vmatprep.mubr.bf16.mxu0 0
    %394 = vmatmul.mubr.bf16.gmra.mxu0 %v289
    %v395 = vpop.f32.mrf.mxu0
    %v396 = vadd.f32 %v311, %v395
    %v397 = vpop.f32.mrf.mxu0
    %v398 = vpop.f32.mrf.mxu0
    %v399 = vpop.f32.mrf.mxu0
    %400 = vdwg.mxu0
    %v401 = vmax.f32 %v396, 0.0
    %v402 = vpack.c.bf16 %v401, %v401
    %v403 = vld [vmem:[#allocation8] sm:$0xf]
    %v404 = vld [vmem:[#allocation8 + $0x4] sm:$0xf]
    %v405 = vld [vmem:[#allocation8 + $0x8] sm:$0xf]
    %v406 = vld [vmem:[#allocation8 + $0xc] sm:$0xf]
    %v407 = vld [vmem:[#allocation8 + $0x10] sm:$0xf]
    %v408 = vld [vmem:[#allocation8 + $0x14] sm:$0xf]
    %v409 = vld [vmem:[#allocation8 + $0x18] sm:$0xf]
    %v410 = vld [vmem:[#allocation8 + $0x1c] sm:$0xf]
    %v411 = vld [vmem:[#allocation8 + $0x20] sm:$0xf]
    %v412 = vld [vmem:[#allocation8 + $0x24] sm:$0xf]
    %v413 = vld [vmem:[#allocation8 + $0x28] sm:$0xf]
    %v414 = vld [vmem:[#allocation8 + $0x2c] sm:$0xf]
    %v415 = vld [vmem:[#allocation8 + $0x30] sm:$0xf]
    %v416 = vld [vmem:[#allocation8 + $0x34] sm:$0xf]
    %v417 = vld [vmem:[#allocation8 + $0x38] sm:$0xf]
    %v418 = vld [vmem:[#allocation8 + $0x3c] sm:$0xf]
    %v419 = vld [vmem:[%s6] sm:$0x1]
    %v421 = vlaneseq
    %v422 = vshrl.u32 %v421, 7
    %v423 = vsub.s32 0, %v422
    %v424 = vrot.slane %v419, %v423
    %v442 = vunpack.c.l.b16 %v403
    %v443 = vunpack.c.l.b16 %v404
    %v444 = vunpack.c.l.b16 %v405
    %v445 = vunpack.c.l.b16 %v406
    %v446 = vunpack.c.l.b16 %v407
    %v447 = vunpack.c.l.b16 %v408
    %v448 = vunpack.c.l.b16 %v409
    %v449 = vunpack.c.l.b16 %v410
    %v450 = vunpack.c.l.b16 %v411
    %v451 = vunpack.c.l.b16 %v412
    %v452 = vunpack.c.l.b16 %v413
    %v453 = vunpack.c.l.b16 %v414
    %v454 = vunpack.c.l.b16 %v415
    %v455 = vunpack.c.l.b16 %v416
    %v456 = vunpack.c.l.b16 %v417
    %v457 = vunpack.c.l.b16 %v418
    %v458 = vpack.c.b16 %v443, %v442
    %v459 = vpack.c.b16 %v445, %v444
    %v460 = vpack.c.b16 %v447, %v446
    %v461 = vpack.c.b16 %v449, %v448
    %v462 = vpack.c.b16 %v451, %v450
    %v463 = vpack.c.b16 %v453, %v452
    %v464 = vpack.c.b16 %v455, %v454
    %v465 = vpack.c.b16 %v457, %v456
    %474 = vmatprep.subr.bf16.mxu0 0
    %475 = vmatpush1.bf16.msra.mxu0 %v465
    %476 = vmatprep.subr.bf16.mxu0 0
    %477 = vmatpush1.bf16.msra.mxu0 %v464
    %478 = vmatprep.subr.bf16.mxu0 0
    %479 = vmatpush1.bf16.msra.mxu0 %v463
    %480 = vmatprep.subr.bf16.mxu0 0
    %481 = vmatpush1.bf16.msra.mxu0 %v462
    %482 = vmatprep.subr.bf16.mxu0 0
    %483 = vmatpush1.bf16.msra.mxu0 %v461
    %484 = vmatprep.subr.bf16.mxu0 0
    %485 = vmatpush1.bf16.msra.mxu0 %v460
    %486 = vmatprep.subr.bf16.mxu0 0
    %487 = vmatpush1.bf16.msra.mxu0 %v459
    %488 = vmatprep.subr.bf16.mxu0 0
    %489 = vmatpush1.bf16.msra.mxu0 %v458
    %490 = vmatprep.subr.bf16.mxu0 0
    %491 = vmatpush2.bf16.msra.mxu0 0
    %492 = vmatprep.subr.bf16.mxu0 0
    %493 = vmatpush2.bf16.msra.mxu0 0
    %494 = vmatprep.subr.bf16.mxu0 0
    %495 = vmatpush2.bf16.msra.mxu0 0
    %496 = vmatprep.subr.bf16.mxu0 0
    %497 = vmatpush2.bf16.msra.mxu0 0
    %498 = vmatprep.subr.bf16.mxu0 0
    %499 = vmatpush2.bf16.msra.mxu0 0
    %500 = vmatprep.subr.bf16.mxu0 0
    %501 = vmatpush2.bf16.msra.mxu0 0
    %502 = vmatprep.subr.bf16.mxu0 0
    %503 = vmatpush2.bf16.msra.mxu0 0
    %504 = vmatprep.subr.bf16.mxu0 0
    %505 = vmatpush2.bf16.msra.mxu0 0
    %506 = vmatprep.mubr.bf16.mxu0 0
    %507 = vmatmul.mubr.bf16.gmra.mxu0 %v402
    %v508 = vpop.f32.mrf.mxu0
    %v509 = vadd.f32 %v424, %v508
    %v510 = vpop.f32.mrf.mxu0
    %v511 = vpop.f32.mrf.mxu0
    %v512 = vpop.f32.mrf.mxu0
    %513 = vdwg.mxu0
    %v514 = vpack.c.bf16 %v509, %v509
    %v517 = vunpack.c.l.s4 1966171168
    %v518 = vunpack.c.0.s8 %v517
    %v519 = vlaneseq
    %v520 = vshrl.u32 %v519, 7
    %v521 = vsub.s32 %v518, %v520
    %v522 = vrot.slane %v514, %v521
    %v523 = vcombine.high %v522, %v522
    %v525 = vunpack.c.l.s4 1966171168
    %v526 = vunpack.c.0.s8 %v525
    %v527 = vlaneseq
    %v528 = vshrl.u32 %v527, 7
    %v529 = vsub.s32 %v526, %v528
    %v530 = vrot.slane %v522, %v529
    %v532 = vunpack.c.l.s4 1966171168
    %v533 = vunpack.c.0.s8 %v532
    %v534 = vlaneseq
    %v535 = vshrl.u32 %v534, 7
    %v536 = vsub.s32 %v533, %v535
    %v537 = vrot.slane %v523, %v536
    %v538 = vcombine.high %v530, %v530
    %v539 = vcombine.high %v537, %v537
    %544 = vst [vmem:[#allocation10] sm:$0x1] %v530
    %545 = vst [vmem:[#allocation10 + $0x1] sm:$0x1] %v537
    %546 = vst [vmem:[#allocation10 + $0x2] sm:$0x1] %v538
    %547 = vst [vmem:[#allocation10 + $0x3] sm:$0x1] %v539
    // Predicated region
    $region46: #{tpu_custom_call.1} parent=1 // pred_check
      _
    $region47: #{tpu_custom_call.1} parent=1 // pred_check_branch
      %549 = sbr.rel (0) target = $region49
    $region48: #{tpu_custom_call.1} parent=1 // pred_region
      %s551 = ssub.s32 64, 16
      %552 = vsyncadd [#allocation4], %s551
      %s553 = sshll.u32 [#allocation10], 4
      %s554 = int_to_ptr.vmem [resolvable:$true] %s553
      %559 = dma.vmem_to_hbm [thread:$0]  %s554, 16, %s7, [#allocation4], 16, 16, 1
    $region49: #{tpu_custom_call.1} parent=1 // pred_fallthru
      _
    // Predicated region
    $region50: #{tpu_custom_call.1} parent=1 // pred_check
      _
    $region51: #{tpu_custom_call.1} parent=1 // pred_check_branch
      %561 = sbr.rel (0) target = $region53
    $region52: #{tpu_custom_call.1} parent=1 // pred_region
      %562 = dma.done [#allocation4], 64
    $region53: #{tpu_custom_call.1} parent=1 // pred_fallthru
      _
    %563 = vsyncpa [#allocation3], 1
    %564 = vsyncpa [#allocation6], 1
    %565 = vsyncpa [#allocation9], 1
    %566 = vsyncpa [#allocation4], 1

</llo_original>
